<compile_context>
chip_gen: v7x
topology: tpu7x:2x2x1
jax: 0.10.0
libtpu: 0.0.40
codegen_flags: <defaults>
</compile_context>

<pallas_src>
import functools

import jax
import jax.numpy as jnp
from jax.experimental import pallas as pl
from jax.experimental.pallas import tpu as pltpu

STATE_SIZE = 24
ACTION_SIZE = 2
EMBED_DIM = 128
MAX_ROW_TILE = 1024  # rows per grid step (sublane aligned, VMEM-safe on v5e/v6e/v7x)


def _leaky_relu(x, slope=0.1):
    return jnp.where(x > 0, x, slope * x)


def _round_up(x, m):
    return ((x + m - 1) // m) * m


def critic_kernel(s_ref, a_ref,
                  w1_ref, b1_ref,
                  w2s_ref, w2a_ref, b2_ref,
                  w3_ref, b3_ref,
                  w4r_ref, b4_ref,
                  out_ref):
    # Activations -> bf16 on the VPU (free slot); MXU accumulates in f32.
    s = s_ref[...].astype(jnp.bfloat16)      # (TM, S)
    a = a_ref[...]                            # (TM, A) f32

    # fc1 + LeakyReLU(0.1)
    h1 = jnp.dot(s, w1_ref[...], preferred_element_type=jnp.float32) + b1_ref[...]
    h1 = _leaky_relu(h1)

    # Action path of fc2 as a rank-A VPU update (A == 2) instead of a K=2
    # MXU matmul; folded together with the bias.
    act = b2_ref[...]                         # (1, E) f32
    for j in range(ACTION_SIZE):              # static, unrolled
        act = act + a[:, j:j + 1] * w2a_ref[j:j + 1, :]

    # fc2 state path (MXU) + action path (VPU) + LeakyReLU
    h2 = jnp.dot(h1.astype(jnp.bfloat16), w2s_ref[...],
                 preferred_element_type=jnp.float32) + act
    h2 = _leaky_relu(h2)

    # fc3 + LeakyReLU
    h3 = jnp.dot(h2.astype(jnp.bfloat16), w3_ref[...],
                 preferred_element_type=jnp.float32) + b3_ref[...]
    h3 = _leaky_relu(h3)

    # fc4 (linear): VPU multiply + XLU lane reduction instead of a 1-wide matmul
    out_ref[...] = (jnp.sum(h3 * w4r_ref[...], axis=-1, keepdims=True)
                    + b4_ref[0, 0])


def _full_spec(shape):
    # Weight / bias blocks: whole array, same block for every grid step
    # (Pallas skips the re-DMA when the block index is unchanged).
    return pl.BlockSpec(shape, lambda i: tuple(0 for _ in shape))


@functools.partial(jax.jit, static_argnames=("agent",))
def critic_forward(params, states, actions, agent=0):
    """states: (B, N, state_size), actions: (B, N, action_size) -> (B, N, 1)."""
    B, N, S = states.shape
    A = actions.shape[-1]
    E = EMBED_DIM

    if agent == 0:
        w1, b1 = params["w1_agent0"], params["b1_agent0"]
    else:
        w1, b1 = params["w1_agent1"], params["b1_agent1"]

    # split fc2 weight into state-embedding part and action part
    w2 = params["w2"]                      # (E + A, E)
    w2s, w2a = w2[:E, :], w2[E:, :]
    b2 = params["b2"]
    w3, b3 = params["w3"], params["b3"]
    w4, b4 = params["w4"], params["b4"]

    # flatten leading dims to rows; reshape of contiguous arrays is free
    M = B * N
    s2d = states.reshape(M, S).astype(jnp.float32)
    a2d = actions.reshape(M, A).astype(jnp.float32)

    # Row tile: as large as possible, but guarantee >= 2 grid steps once
    # M >= 16 so v7x's two TensorCores both get work on the "parallel" axis.
    row_tile = min(MAX_ROW_TILE, max(8, _round_up(pl.cdiv(M, 2), 8)))
    grid = (pl.cdiv(M, row_tile),)

    out = pl.pallas_call(
        critic_kernel,
        out_shape=jax.ShapeDtypeStruct((M, 1), jnp.float32),
        grid_spec=pltpu.PrefetchScalarGridSpec(
            num_scalar_prefetch=0,
            grid=grid,
            in_specs=[
                pl.BlockSpec((row_tile, S), lambda i: (i, 0)),  # states rows
                pl.BlockSpec((row_tile, A), lambda i: (i, 0)),  # action rows
                _full_spec((S, E)),   # w1 (bf16)
                _full_spec((1, E)),   # b1
                _full_spec((E, E)),   # w2 state part (bf16)
                _full_spec((A, E)),   # w2 action part (f32, used on VPU)
                _full_spec((1, E)),   # b2
                _full_spec((E, E)),   # w3 (bf16)
                _full_spec((1, E)),   # b3
                _full_spec((1, E)),   # w4 as a row (VPU mul + lane reduce)
                pl.BlockSpec(memory_space=pltpu.MemorySpace.SMEM),  # b4 scalar
            ],
            out_specs=pl.BlockSpec((row_tile, 1), lambda i: (i, 0)),
        ),
        compiler_params=pltpu.CompilerParams(
            dimension_semantics=("parallel",)),
    )(s2d, a2d,
      w1.astype(jnp.bfloat16), b1.reshape(1, E),
      w2s.astype(jnp.bfloat16), w2a, b2.reshape(1, E),
      w3.astype(jnp.bfloat16), b3.reshape(1, E),
      w4.reshape(1, E), b4.reshape(1, 1))

    return out.reshape(B, N, 1)


def init_params(key, state_size=STATE_SIZE, action_size=ACTION_SIZE,
                embed_dim=EMBED_DIM):
    """Deterministic PyTorch-Linear-style init: U(-1/sqrt(fan_in), 1/sqrt(fan_in)).

    Weights are stored transposed relative to torch (in_features, out_features)
    so the kernel computes x @ W + b.
    """
    def linear(k, fan_in, fan_out):
        kw, kb = jax.random.split(k)
        bound = 1.0 / jnp.sqrt(fan_in)
        w = jax.random.uniform(kw, (fan_in, fan_out), jnp.float32, -bound, bound)
        b = jax.random.uniform(kb, (fan_out,), jnp.float32, -bound, bound)
        return w, b

    keys = jax.random.split(key, 5)
    w1a0, b1a0 = linear(keys[0], state_size, embed_dim)
    w1a1, b1a1 = linear(keys[1], state_size, embed_dim)
    w2, b2 = linear(keys[2], embed_dim + action_size, embed_dim)
    w3, b3 = linear(keys[3], embed_dim, embed_dim)
    w4, b4 = linear(keys[4], embed_dim, 1)
    return {
        "w1_agent0": w1a0, "b1_agent0": b1a0,
        "w1_agent1": w1a1, "b1_agent1": b1a1,
        "w2": w2, "b2": b2,
        "w3": w3, "b3": b3,
        "w4": w4, "b4": b4,
    }


def critic_reference(params, states, actions, agent=0):
    """Pure-JAX f32 reference mirroring the torch forward exactly."""
    if agent == 0:
        w1, b1 = params["w1_agent0"], params["b1_agent0"]
    else:
        w1, b1 = params["w1_agent1"], params["b1_agent1"]
    lrelu = lambda x: jnp.where(x > 0, x, 0.1 * x)
    h = lrelu(states @ w1 + b1)
    x_cat = jnp.concatenate([h, actions], axis=2)
    x = lrelu(x_cat @ params["w2"] + params["b2"])
    x = lrelu(x @ params["w3"] + params["b3"])
    return x @ params["w4"] + params["b4"]


if __name__ == "__main__":
    key = jax.random.PRNGKey(0)
    kp, ks, ka, ks2, ka2 = jax.random.split(key, 5)

    params = init_params(kp)

    # small shapes consistent with the module: (batch, seq, state_size)
    B, N = 2, 3
    states = jax.random.normal(ks, (B, N, STATE_SIZE), jnp.float32)
    actions = jax.random.normal(ka, (B, N, ACTION_SIZE), jnp.float32)

    out0 = critic_forward(params, states, actions, agent=0)
    out1 = critic_forward(params, states, actions, agent=1)
    jax.block_until_ready((out0, out1))

    ref0 = critic_reference(params, states, actions, agent=0)
    ref1 = critic_reference(params, states, actions, agent=1)
    assert out0.shape == (B, N, 1) and out1.shape == (B, N, 1)
    # bf16 MXU operands -> loosened tolerance vs the f32 reference
    assert jnp.allclose(out0, ref0, atol=2e-2, rtol=2e-2)
    assert jnp.allclose(out1, ref1, atol=2e-2, rtol=2e-2)

    # larger, non-multiple-of-tile batch exercising multi-step grid + ragged edge
    B2, N2 = 37, 29
    states2 = jax.random.normal(ks2, (B2, N2, STATE_SIZE), jnp.float32)
    actions2 = jax.random.normal(ka2, (B2, N2, ACTION_SIZE), jnp.float32)
    out2 = critic_forward(params, states2, actions2, agent=0)
    jax.block_until_ready(out2)
    ref2 = critic_reference(params, states2, actions2, agent=0)
    assert out2.shape == (B2, N2, 1)
    assert jnp.allclose(out2, ref2, atol=2e-2, rtol=2e-2)

    print("KERNEL_OK")
</pallas_src>

<mosaic_0001>
module attributes {stable_mosaic.version = 11 : i64} {
  func.func @critic_kernel(%arg0: i32, %arg1: memref<8x24xf32, #tpu.memory_space<vmem>>, %arg2: memref<8x2xf32, #tpu.memory_space<vmem>>, %arg3: memref<24x128xbf16, #tpu.memory_space<vmem>>, %arg4: memref<1x128xf32, #tpu.memory_space<vmem>>, %arg5: memref<128x128xbf16, #tpu.memory_space<vmem>>, %arg6: memref<2x128xf32, #tpu.memory_space<vmem>>, %arg7: memref<1x128xf32, #tpu.memory_space<vmem>>, %arg8: memref<128x128xbf16, #tpu.memory_space<vmem>>, %arg9: memref<1x128xf32, #tpu.memory_space<vmem>>, %arg10: memref<1x128xf32, #tpu.memory_space<vmem>>, %arg11: memref<1x1xf32, #tpu.memory_space<smem>>, %arg12: memref<8x1xf32, #tpu.memory_space<vmem>>) attributes {dimension_semantics = [#tpu.dimension_semantics<parallel>], iteration_bounds = array<i64: 1>, scalar_prefetch = 0 : i64, scratch_operands = 0 : i64, tpu.core_type = #tpu.core_type<tc>, window_params = [{transform_indices = @transform_0, window_bounds = array<i64: 8, 24>}, {transform_indices = @transform_1, window_bounds = array<i64: 8, 2>}, {pipeline_mode = #tpu.pipeline_mode<synchronous>, transform_indices = @transform_2, window_bounds = array<i64: 24, 128>}, {pipeline_mode = #tpu.pipeline_mode<synchronous>, transform_indices = @transform_3, window_bounds = array<i64: 1, 128>}, {pipeline_mode = #tpu.pipeline_mode<synchronous>, transform_indices = @transform_4, window_bounds = array<i64: 128, 128>}, {pipeline_mode = #tpu.pipeline_mode<synchronous>, transform_indices = @transform_5, window_bounds = array<i64: 2, 128>}, {pipeline_mode = #tpu.pipeline_mode<synchronous>, transform_indices = @transform_6, window_bounds = array<i64: 1, 128>}, {pipeline_mode = #tpu.pipeline_mode<synchronous>, transform_indices = @transform_7, window_bounds = array<i64: 128, 128>}, {pipeline_mode = #tpu.pipeline_mode<synchronous>, transform_indices = @transform_8, window_bounds = array<i64: 1, 128>}, {pipeline_mode = #tpu.pipeline_mode<synchronous>, transform_indices = @transform_9, window_bounds = array<i64: 1, 128>}, {transform_indices = @transform_10, window_bounds = array<i64: 1, 1>}, {transform_indices = @transform_11, window_bounds = array<i64: 8, 1>}]} {
    %c0 = arith.constant 0 : index
    %c0_0 = arith.constant 0 : index
    %0 = vector.load %arg1[%c0, %c0_0] : memref<8x24xf32, #tpu.memory_space<vmem>>, vector<8x24xf32>
    %1 = arith.truncf %0 : vector<8x24xf32> to vector<8x24xbf16>
    %c0_1 = arith.constant 0 : index
    %c0_2 = arith.constant 0 : index
    %2 = vector.load %arg2[%c0_1, %c0_2] : memref<8x2xf32, #tpu.memory_space<vmem>>, vector<8x2xf32>
    %c0_3 = arith.constant 0 : index
    %c0_4 = arith.constant 0 : index
    %3 = vector.load %arg3[%c0_3, %c0_4] : memref<24x128xbf16, #tpu.memory_space<vmem>>, vector<24x128xbf16>
    %cst = arith.constant dense<0.000000e+00> : vector<8x128xf32>
    %4 = tpu.matmul %1, %3, %cst {dimension_numbers = #tpu.dot_dimension_numbers<[1], [0], [0], [1], [0, 0, 1, 1], [], []>} : vector<8x24xbf16>, vector<24x128xbf16>, vector<8x128xf32> -> vector<8x128xf32>
    %c0_5 = arith.constant 0 : index
    %c0_6 = arith.constant 0 : index
    %5 = vector.load %arg4[%c0_5, %c0_6] : memref<1x128xf32, #tpu.memory_space<vmem>>, vector<1x128xf32>
    %6 = vector.broadcast %5 : vector<1x128xf32> to vector<8x128xf32>
    %7 = arith.addf %4, %6 : vector<8x128xf32>
    %cst_7 = arith.constant 0.000000e+00 : f32
    %8 = vector.broadcast %cst_7 : f32 to vector<8x128xf32>
    %9 = arith.cmpf ogt, %7, %8 : vector<8x128xf32>
    %cst_8 = arith.constant 1.000000e-01 : f32
    %10 = vector.broadcast %cst_8 : f32 to vector<8x128xf32>
    %11 = arith.mulf %10, %7 : vector<8x128xf32>
    %12 = arith.select %9, %7, %11 : vector<8x128xi1>, vector<8x128xf32>
    %c0_9 = arith.constant 0 : index
    %c0_10 = arith.constant 0 : index
    %13 = vector.load %arg7[%c0_9, %c0_10] : memref<1x128xf32, #tpu.memory_space<vmem>>, vector<1x128xf32>
    %14 = vector.extract_strided_slice %2 {offsets = [0, 0], sizes = [8, 1], strides = [1, 1]} : vector<8x2xf32> to vector<8x1xf32>
    %c0_11 = arith.constant 0 : index
    %c0_12 = arith.constant 0 : index
    %15 = vector.load %arg6[%c0_11, %c0_12] : memref<2x128xf32, #tpu.memory_space<vmem>>, vector<1x128xf32>
    %16 = vector.broadcast %14 : vector<8x1xf32> to vector<8x128xf32>
    %17 = vector.broadcast %15 : vector<1x128xf32> to vector<8x128xf32>
    %18 = arith.mulf %16, %17 : vector<8x128xf32>
    %19 = vector.broadcast %13 : vector<1x128xf32> to vector<8x128xf32>
    %20 = arith.addf %19, %18 : vector<8x128xf32>
    %21 = vector.extract_strided_slice %2 {offsets = [0, 1], sizes = [8, 1], strides = [1, 1]} : vector<8x2xf32> to vector<8x1xf32>
    %c1 = arith.constant 1 : index
    %c0_13 = arith.constant 0 : index
    %22 = vector.load %arg6[%c1, %c0_13] : memref<2x128xf32, #tpu.memory_space<vmem>>, vector<1x128xf32>
    %23 = vector.broadcast %21 : vector<8x1xf32> to vector<8x128xf32>
    %24 = vector.broadcast %22 : vector<1x128xf32> to vector<8x128xf32>
    %25 = arith.mulf %23, %24 : vector<8x128xf32>
    %26 = arith.addf %20, %25 : vector<8x128xf32>
    %27 = arith.truncf %12 : vector<8x128xf32> to vector<8x128xbf16>
    %c0_14 = arith.constant 0 : index
    %c0_15 = arith.constant 0 : index
    %28 = vector.load %arg5[%c0_14, %c0_15] : memref<128x128xbf16, #tpu.memory_space<vmem>>, vector<128x128xbf16>
    %cst_16 = arith.constant dense<0.000000e+00> : vector<8x128xf32>
    %29 = tpu.matmul %27, %28, %cst_16 {dimension_numbers = #tpu.dot_dimension_numbers<[1], [0], [0], [1], [0, 0, 1, 1], [], []>} : vector<8x128xbf16>, vector<128x128xbf16>, vector<8x128xf32> -> vector<8x128xf32>
    %30 = arith.addf %29, %26 : vector<8x128xf32>
    %cst_17 = arith.constant 0.000000e+00 : f32
    %31 = vector.broadcast %cst_17 : f32 to vector<8x128xf32>
    %32 = arith.cmpf ogt, %30, %31 : vector<8x128xf32>
    %cst_18 = arith.constant 1.000000e-01 : f32
    %33 = vector.broadcast %cst_18 : f32 to vector<8x128xf32>
    %34 = arith.mulf %33, %30 : vector<8x128xf32>
    %35 = arith.select %32, %30, %34 : vector<8x128xi1>, vector<8x128xf32>
    %36 = arith.truncf %35 : vector<8x128xf32> to vector<8x128xbf16>
    %c0_19 = arith.constant 0 : index
    %c0_20 = arith.constant 0 : index
    %37 = vector.load %arg8[%c0_19, %c0_20] : memref<128x128xbf16, #tpu.memory_space<vmem>>, vector<128x128xbf16>
    %cst_21 = arith.constant dense<0.000000e+00> : vector<8x128xf32>
    %38 = tpu.matmul %36, %37, %cst_21 {dimension_numbers = #tpu.dot_dimension_numbers<[1], [0], [0], [1], [0, 0, 1, 1], [], []>} : vector<8x128xbf16>, vector<128x128xbf16>, vector<8x128xf32> -> vector<8x128xf32>
    %c0_22 = arith.constant 0 : index
    %c0_23 = arith.constant 0 : index
    %39 = vector.load %arg9[%c0_22, %c0_23] : memref<1x128xf32, #tpu.memory_space<vmem>>, vector<1x128xf32>
    %40 = vector.broadcast %39 : vector<1x128xf32> to vector<8x128xf32>
    %41 = arith.addf %38, %40 : vector<8x128xf32>
    %cst_24 = arith.constant 0.000000e+00 : f32
    %42 = vector.broadcast %cst_24 : f32 to vector<8x128xf32>
    %43 = arith.cmpf ogt, %41, %42 : vector<8x128xf32>
    %cst_25 = arith.constant 1.000000e-01 : f32
    %44 = vector.broadcast %cst_25 : f32 to vector<8x128xf32>
    %45 = arith.mulf %44, %41 : vector<8x128xf32>
    %46 = arith.select %43, %41, %45 : vector<8x128xi1>, vector<8x128xf32>
    %c0_26 = arith.constant 0 : index
    %c0_27 = arith.constant 0 : index
    %47 = vector.load %arg10[%c0_26, %c0_27] : memref<1x128xf32, #tpu.memory_space<vmem>>, vector<1x128xf32>
    %48 = vector.broadcast %47 : vector<1x128xf32> to vector<8x128xf32>
    %49 = arith.mulf %46, %48 : vector<8x128xf32>
    %cst_28 = arith.constant dense<0.000000e+00> : vector<8xf32>
    %50 = vector.multi_reduction <add>, %49, %cst_28 [1] : vector<8x128xf32> to vector<8xf32>
    %51 = vector.shape_cast %50 : vector<8xf32> to vector<8x1xf32>
    %c0_29 = arith.constant 0 : index
    %c0_30 = arith.constant 0 : index
    %52 = memref.load %arg11[%c0_29, %c0_30] : memref<1x1xf32, #tpu.memory_space<smem>>
    %53 = vector.broadcast %52 : f32 to vector<8x1xf32>
    %54 = arith.addf %51, %53 : vector<8x1xf32>
    %c0_31 = arith.constant 0 : index
    %c0_32 = arith.constant 0 : index
    %55 = vector.load %arg12[%c0_31, %c0_32] : memref<8x1xf32, #tpu.memory_space<vmem>>, vector<8x1xf32>
    tpu.vector_store %arg12[%c0_31, %c0_32], %54 {strides = array<i32>} : memref<8x1xf32, #tpu.memory_space<vmem>>, vector<8x1xf32>,
    return
  }
  func.func @transform_0(%arg0: i32) -> (i32, i32) {
    %c0_i32 = arith.constant 0 : i32
    %c0_i32_0 = arith.constant 0 : i32
    return %arg0, %c0_i32 : i32, i32
  }
  func.func @transform_1(%arg0: i32) -> (i32, i32) {
    %c0_i32 = arith.constant 0 : i32
    %c0_i32_0 = arith.constant 0 : i32
    return %arg0, %c0_i32 : i32, i32
  }
  func.func @transform_2(%arg0: i32) -> (i32, i32) {
    %c0_i32 = arith.constant 0 : i32
    %c0_i32_0 = arith.constant 0 : i32
    %c0_i32_1 = arith.constant 0 : i32
    return %c0_i32, %c0_i32_0 : i32, i32
  }
  func.func @transform_3(%arg0: i32) -> (i32, i32) {
    %c0_i32 = arith.constant 0 : i32
    %c0_i32_0 = arith.constant 0 : i32
    %c0_i32_1 = arith.constant 0 : i32
    return %c0_i32, %c0_i32_0 : i32, i32
  }
  func.func @transform_4(%arg0: i32) -> (i32, i32) {
    %c0_i32 = arith.constant 0 : i32
    %c0_i32_0 = arith.constant 0 : i32
    %c0_i32_1 = arith.constant 0 : i32
    return %c0_i32, %c0_i32_0 : i32, i32
  }
  func.func @transform_5(%arg0: i32) -> (i32, i32) {
    %c0_i32 = arith.constant 0 : i32
    %c0_i32_0 = arith.constant 0 : i32
    %c0_i32_1 = arith.constant 0 : i32
    return %c0_i32, %c0_i32_0 : i32, i32
  }
  func.func @transform_6(%arg0: i32) -> (i32, i32) {
    %c0_i32 = arith.constant 0 : i32
    %c0_i32_0 = arith.constant 0 : i32
    %c0_i32_1 = arith.constant 0 : i32
    return %c0_i32, %c0_i32_0 : i32, i32
  }
  func.func @transform_7(%arg0: i32) -> (i32, i32) {
    %c0_i32 = arith.constant 0 : i32
    %c0_i32_0 = arith.constant 0 : i32
    %c0_i32_1 = arith.constant 0 : i32
    return %c0_i32, %c0_i32_0 : i32, i32
  }
  func.func @transform_8(%arg0: i32) -> (i32, i32) {
    %c0_i32 = arith.constant 0 : i32
    %c0_i32_0 = arith.constant 0 : i32
    %c0_i32_1 = arith.constant 0 : i32
    return %c0_i32, %c0_i32_0 : i32, i32
  }
  func.func @transform_9(%arg0: i32) -> (i32, i32) {
    %c0_i32 = arith.constant 0 : i32
    %c0_i32_0 = arith.constant 0 : i32
    %c0_i32_1 = arith.constant 0 : i32
    return %c0_i32, %c0_i32_0 : i32, i32
  }
  func.func @transform_10(%arg0: i32) -> (i32, i32) {
    %c0_i32 = arith.constant 0 : i32
    %c0_i32_0 = arith.constant 0 : i32
    %c0_i32_1 = arith.constant 0 : i32
    return %c0_i32, %c0_i32_0 : i32, i32
  }
  func.func @transform_11(%arg0: i32) -> (i32, i32) {
    %c0_i32 = arith.constant 0 : i32
    %c0_i32_0 = arith.constant 0 : i32
    return %arg0, %c0_i32 : i32, i32
  }
}

</mosaic_0001>

<llo_original>
// kernel: critic_forward.1
$region0: #{critic_forward.1}
  #allocation0 [shape = 'u32[]', space=smem, size = 0x4, offset = 0x4, fixed_abs, tag = 'smem constant byte address 0x4 - core index']
  #allocation1 [shape = 'u32[144,128]{1,0:T(1,128)}', space=vmem, size = 0x12000, scoped, tag = 'internal scratch']
  #allocation2 [shape = 'f32[1,1]{1,0:T(1,128)S(6)}', space=smem, size = 0x200, scoped, tag = 'scoped memory for critic_forward.1']
  %s0 = inlined_call_operand.vmem [shape: f32[6,24], index: 0, kind: input, shape index: {}]
  %s1 = inlined_call_operand.vmem [shape: f32[6,2], index: 1, kind: input, shape index: {}]
  %s2 = inlined_call_operand.vmem [shape: bf16[24,128], index: 2, kind: input, shape index: {}]
  %s3 = inlined_call_operand.vmem [shape: f32[1,128], index: 3, kind: input, shape index: {}]
  %s4 = inlined_call_operand.vmem [shape: bf16[128,128], index: 4, kind: input, shape index: {}]
  %s5 = inlined_call_operand.vmem [shape: f32[2,128], index: 5, kind: input, shape index: {}]
  %s6 = inlined_call_operand.vmem [shape: f32[1,128], index: 6, kind: input, shape index: {}]
  %s7 = inlined_call_operand.vmem [shape: bf16[128,128], index: 7, kind: input, shape index: {}]
  %s8 = inlined_call_operand.vmem [shape: f32[1,128], index: 8, kind: input, shape index: {}]
  %s9 = inlined_call_operand.vmem [shape: f32[1,128], index: 9, kind: input, shape index: {}]
  %s10 = inlined_call_operand.<no memory space> [shape: f32[1,1], index: 10, kind: input, shape index: {}]
  %s11 = inlined_call_operand.vmem [shape: f32[6,1], index: 11, kind: output, shape index: {}]
  %s12 = sld [smem:[#allocation0]]
  $region54: #{critic_forward.1} parent=0
    _
  %s14 = ssub.s32 1, %s12
  %s15 = scalar_select 0, %s14, %s12
  %16 = sst [smem:[#allocation2]] %s10
  // Predicated region
  $region2: #{critic_forward.1} parent=0 // pred_check
    _
  $region3: #{critic_forward.1} parent=0 // pred_check_branch
    %18 = sbr.rel (0) target = $region5
  $region4: #{critic_forward.1} parent=0 // pred_region
    _
  $region5: #{critic_forward.1} parent=0 // pred_fallthru
    _
  // Predicated region
  $region6: #{critic_forward.1} parent=0 // pred_check
    _
  $region7: #{critic_forward.1} parent=0 // pred_check_branch
    %20 = sbr.rel (0) target = $region9
  $region8: #{critic_forward.1} parent=0 // pred_region
    _
  $region9: #{critic_forward.1} parent=0 // pred_fallthru
    _
  // Predicated region
  $region10: #{critic_forward.1} parent=0 // pred_check
    _
  $region11: #{critic_forward.1} parent=0 // pred_check_branch
    %22 = sbr.rel (0) target = $region13
  $region12: #{critic_forward.1} parent=0 // pred_region
    _
  $region13: #{critic_forward.1} parent=0 // pred_fallthru
    _
  // Predicated region
  $region14: #{critic_forward.1} parent=0 // pred_check
    _
  $region15: #{critic_forward.1} parent=0 // pred_check_branch
    %24 = sbr.rel (0) target = $region17
  $region16: #{critic_forward.1} parent=0 // pred_region
    _
  $region17: #{critic_forward.1} parent=0 // pred_fallthru
    _
  // Predicated region
  $region18: #{critic_forward.1} parent=0 // pred_check
    _
  $region19: #{critic_forward.1} parent=0 // pred_check_branch
    %26 = sbr.rel (0) target = $region21
  $region20: #{critic_forward.1} parent=0 // pred_region
    _
  $region21: #{critic_forward.1} parent=0 // pred_fallthru
    _
  // Predicated region
  $region22: #{critic_forward.1} parent=0 // pred_check
    _
  $region23: #{critic_forward.1} parent=0 // pred_check_branch
    %28 = sbr.rel (0) target = $region25
  $region24: #{critic_forward.1} parent=0 // pred_region
    _
  $region25: #{critic_forward.1} parent=0 // pred_fallthru
    _
  // Predicated region
  $region26: #{critic_forward.1} parent=0 // pred_check
    _
  $region27: #{critic_forward.1} parent=0 // pred_check_branch
    %30 = sbr.rel (0) target = $region29
  $region28: #{critic_forward.1} parent=0 // pred_region
    _
  $region29: #{critic_forward.1} parent=0 // pred_fallthru
    _
  // Predicated region
  $region30: #{critic_forward.1} parent=0 // pred_check
    _
  $region31: #{critic_forward.1} parent=0 // pred_check_branch
    %32 = sbr.rel (0) target = $region33
  $region32: #{critic_forward.1} parent=0 // pred_region
    _
  $region33: #{critic_forward.1} parent=0 // pred_fallthru
    _
  // Predicated region
  $region34: #{critic_forward.1} parent=0 // pred_check
    _
  $region35: #{critic_forward.1} parent=0 // pred_check_branch
    %34 = sbr.rel (0) target = $region37
  $region36: #{critic_forward.1} parent=0 // pred_region
    _
  $region37: #{critic_forward.1} parent=0 // pred_fallthru
    _
  // Predicated region
  $region38: #{critic_forward.1} parent=0 // pred_check
    _
  $region39: #{critic_forward.1} parent=0 // pred_check_branch
    %36 = sbr.rel (0) target = $region41
  $region40: #{critic_forward.1} parent=0 // pred_region
    _
  $region41: #{critic_forward.1} parent=0 // pred_fallthru
    _
  // Predicated region
  $region42: #{critic_forward.1} parent=0 // pred_check
    _
  $region43: #{critic_forward.1} parent=0 // pred_check_branch
    %38 = sbr.rel (0) target = $region45
  $region44: #{critic_forward.1} parent=0 // pred_region
    _
  $region45: #{critic_forward.1} parent=0 // pred_fallthru
    _
  %v40 = vld [vmem:[%s0] sm:$0xff]
  %v41 = vpack.c.bf16 %v40, %v40
  %v42 = vld [vmem:[%s1] sm:$0xff]
  %v43 = vld [vmem:[%s2] sm:$0xf]
  %v44 = vld [vmem:[%s2 + $0x4] sm:$0xf]
  %v45 = vld [vmem:[%s2 + $0x8] sm:$0xf]
  %v46 = vld [vmem:[%s3] sm:$0x1]
  %v48 = vlaneseq
  %v49 = vshrl.u32 %v48, 7
  %v50 = vsub.s32 0, %v49
  %v51 = vrot.slane %v46, %v50
  %v56 = vunpack.c.l.b16 %v43
  %v57 = vunpack.c.l.b16 %v44
  %v58 = vunpack.c.l.b16 %v45
  %v59 = vpack.c.b16 %v57, %v56
  %v60 = vpack.c.b16 %v58, %v58
  %vm62 = vcmask 195584
  %v64 = vsel %vm62, %v41, 0
  %vm66 = vcmask 1043456
  %v68 = vsel %vm66, %v60, 0
  %70 = vmatprep.subr.bf16.mxu0 0
  %71 = vmatpush1.bf16.msra.mxu0 %v59
  %72 = vmatprep.subr.bf16.mxu0 0
  %73 = vmatpush1.bf16.msra.mxu0 %v68
  %74 = vmatprep.subr.bf16.mxu0 0
  %75 = vmatpush1.bf16.msra.mxu0 0
  %76 = vmatprep.subr.bf16.mxu0 0
  %77 = vmatpush1.bf16.msra.mxu0 0
  %78 = vmatprep.subr.bf16.mxu0 0
  %79 = vmatpush1.bf16.msra.mxu0 0
  %80 = vmatprep.subr.bf16.mxu0 0
  %81 = vmatpush1.bf16.msra.mxu0 0
  %82 = vmatprep.subr.bf16.mxu0 0
  %83 = vmatpush1.bf16.msra.mxu0 0
  %84 = vmatprep.subr.bf16.mxu0 0
  %85 = vmatpush1.bf16.msra.mxu0 0
  %86 = vmatprep.subr.bf16.mxu0 0
  %87 = vmatpush1.bf16.msra.mxu0 0
  %88 = vmatprep.subr.bf16.mxu0 0
  %89 = vmatpush1.bf16.msra.mxu0 0
  %90 = vmatprep.subr.bf16.mxu0 0
  %91 = vmatpush1.bf16.msra.mxu0 0
  %92 = vmatprep.subr.bf16.mxu0 0
  %93 = vmatpush1.bf16.msra.mxu0 0
  %94 = vmatprep.subr.bf16.mxu0 0
  %95 = vmatpush1.bf16.msra.mxu0 0
  %96 = vmatprep.subr.bf16.mxu0 0
  %97 = vmatpush1.bf16.msra.mxu0 0
  %98 = vmatprep.subr.bf16.mxu0 0
  %99 = vmatpush1.bf16.msra.mxu0 0
  %100 = vmatprep.subr.bf16.mxu0 0
  %101 = vmatpush1.bf16.msra.mxu0 0
  %102 = vmatprep.mubr.bf16.mxu0 0
  %103 = vmatmul.mubr.bf16.gmra.mrb[0].mxu0 %v64
  %v104 = vpop.f32.mrb[0].mxu0
  %v105 = vadd.f32 %v51, %v104
  %v106 = vpop.f32.mrb[0].mxu0
  %v107 = vpop.f32.mrb[0].mxu0
  %v108 = vpop.f32.mrb[0].mxu0
  %109 = vdwg.mxu0
  %vm110 = vcmp.gt.f32.partialorder %v105, 0.0
  %v111 = vmul.f32 %v105, 0.1
  %v112 = vsel %vm110, %v105, %v111
  %v113 = vld [vmem:[%s6] sm:$0x1]
  %v114 = vld [vmem:[%s5] sm:$0x1]
  %116 = vset.pattern.permute.xlu0 0
  %117 = vperm.xlu0 %116, %v42
  %v118 = vpop.permute.xlu0 %117
  %v120 = vlaneseq
  %v121 = vshrl.u32 %v120, 7
  %v122 = vsub.s32 0, %v121
  %v123 = vrot.slane %v114, %v122
  %v124 = vmul.f32 %v118, %v123
  %v126 = vlaneseq
  %v127 = vshrl.u32 %v126, 7
  %v128 = vsub.s32 0, %v127
  %v129 = vrot.slane %v113, %v128
  %v131 = vadd.f32 %v129, %v124
  %v132 = vld [vmem:[%s5 + $0x1] sm:$0x1]
  %133 = vset.pattern.permute.xlu0 1
  %134 = vperm.xlu0 %133, %v42
  %v135 = vpop.permute.xlu0 %134
  %v137 = vlaneseq
  %v138 = vshrl.u32 %v137, 7
  %v139 = vsub.s32 0, %v138
  %v140 = vrot.slane %v132, %v139
  %v141 = vmul.f32 %v135, %v140
  %v142 = vadd.f32 %v131, %v141
  %v143 = vpack.c.bf16 %v112, %v112
  %v144 = vld [vmem:[%s4] sm:$0xf]
  %v145 = vld [vmem:[%s4 + $0x4] sm:$0xf]
  %v146 = vld [vmem:[%s4 + $0x8] sm:$0xf]
  %v147 = vld [vmem:[%s4 + $0xc] sm:$0xf]
  %v148 = vld [vmem:[%s4 + $0x10] sm:$0xf]
  %v149 = vld [vmem:[%s4 + $0x14] sm:$0xf]
  %v150 = vld [vmem:[%s4 + $0x18] sm:$0xf]
  %v151 = vld [vmem:[%s4 + $0x1c] sm:$0xf]
  %v152 = vld [vmem:[%s4 + $0x20] sm:$0xf]
  %v153 = vld [vmem:[%s4 + $0x24] sm:$0xf]
  %v154 = vld [vmem:[%s4 + $0x28] sm:$0xf]
  %v155 = vld [vmem:[%s4 + $0x2c] sm:$0xf]
  %v156 = vld [vmem:[%s4 + $0x30] sm:$0xf]
  %v157 = vld [vmem:[%s4 + $0x34] sm:$0xf]
  %v158 = vld [vmem:[%s4 + $0x38] sm:$0xf]
  %v159 = vld [vmem:[%s4 + $0x3c] sm:$0xf]
  %v176 = vunpack.c.l.b16 %v144
  %v177 = vunpack.c.l.b16 %v145
  %v178 = vunpack.c.l.b16 %v146
  %v179 = vunpack.c.l.b16 %v147
  %v180 = vunpack.c.l.b16 %v148
  %v181 = vunpack.c.l.b16 %v149
  %v182 = vunpack.c.l.b16 %v150
  %v183 = vunpack.c.l.b16 %v151
  %v184 = vunpack.c.l.b16 %v152
  %v185 = vunpack.c.l.b16 %v153
  %v186 = vunpack.c.l.b16 %v154
  %v187 = vunpack.c.l.b16 %v155
  %v188 = vunpack.c.l.b16 %v156
  %v189 = vunpack.c.l.b16 %v157
  %v190 = vunpack.c.l.b16 %v158
  %v191 = vunpack.c.l.b16 %v159
  %v192 = vpack.c.b16 %v177, %v176
  %v193 = vpack.c.b16 %v179, %v178
  %v194 = vpack.c.b16 %v181, %v180
  %v195 = vpack.c.b16 %v183, %v182
  %v196 = vpack.c.b16 %v185, %v184
  %v197 = vpack.c.b16 %v187, %v186
  %v198 = vpack.c.b16 %v189, %v188
  %v199 = vpack.c.b16 %v191, %v190
  %208 = vmatprep.subr.bf16.mxu0 0
  %209 = vmatpush1.bf16.msra.mxu0 %v192
  %210 = vmatprep.subr.bf16.mxu0 0
  %211 = vmatpush1.bf16.msra.mxu0 %v193
  %212 = vmatprep.subr.bf16.mxu0 0
  %213 = vmatpush1.bf16.msra.mxu0 %v194
  %214 = vmatprep.subr.bf16.mxu0 0
  %215 = vmatpush1.bf16.msra.mxu0 %v195
  %216 = vmatprep.subr.bf16.mxu0 0
  %217 = vmatpush1.bf16.msra.mxu0 %v196
  %218 = vmatprep.subr.bf16.mxu0 0
  %219 = vmatpush1.bf16.msra.mxu0 %v197
  %220 = vmatprep.subr.bf16.mxu0 0
  %221 = vmatpush1.bf16.msra.mxu0 %v198
  %222 = vmatprep.subr.bf16.mxu0 0
  %223 = vmatpush1.bf16.msra.mxu0 %v199
  %224 = vmatprep.subr.bf16.mxu0 0
  %225 = vmatpush1.bf16.msra.mxu0 0
  %226 = vmatprep.subr.bf16.mxu0 0
  %227 = vmatpush1.bf16.msra.mxu0 0
  %228 = vmatprep.subr.bf16.mxu0 0
  %229 = vmatpush1.bf16.msra.mxu0 0
  %230 = vmatprep.subr.bf16.mxu0 0
  %231 = vmatpush1.bf16.msra.mxu0 0
  %232 = vmatprep.subr.bf16.mxu0 0
  %233 = vmatpush1.bf16.msra.mxu0 0
  %234 = vmatprep.subr.bf16.mxu0 0
  %235 = vmatpush1.bf16.msra.mxu0 0
  %236 = vmatprep.subr.bf16.mxu0 0
  %237 = vmatpush1.bf16.msra.mxu0 0
  %238 = vmatprep.subr.bf16.mxu0 0
  %239 = vmatpush1.bf16.msra.mxu0 0
  %240 = vmatprep.mubr.bf16.mxu0 0
  %241 = vmatmul.mubr.bf16.gmra.mrb[0].mxu0 %v143
  %v242 = vpop.f32.mrb[0].mxu0
  %v243 = vadd.f32 %v142, %v242
  %v244 = vpop.f32.mrb[0].mxu0
  %v245 = vpop.f32.mrb[0].mxu0
  %v246 = vpop.f32.mrb[0].mxu0
  %247 = vdwg.mxu0
  %vm248 = vcmp.gt.f32.partialorder %v243, 0.0
  %v249 = vmul.f32 %v243, 0.1
  %v250 = vsel %vm248, %v243, %v249
  %v251 = vpack.c.bf16 %v250, %v250
  %v252 = vld [vmem:[%s7] sm:$0xf]
  %v253 = vld [vmem:[%s7 + $0x4] sm:$0xf]
  %v254 = vld [vmem:[%s7 + $0x8] sm:$0xf]
  %v255 = vld [vmem:[%s7 + $0xc] sm:$0xf]
  %v256 = vld [vmem:[%s7 + $0x10] sm:$0xf]
  %v257 = vld [vmem:[%s7 + $0x14] sm:$0xf]
  %v258 = vld [vmem:[%s7 + $0x18] sm:$0xf]
  %v259 = vld [vmem:[%s7 + $0x1c] sm:$0xf]
  %v260 = vld [vmem:[%s7 + $0x20] sm:$0xf]
  %v261 = vld [vmem:[%s7 + $0x24] sm:$0xf]
  %v262 = vld [vmem:[%s7 + $0x28] sm:$0xf]
  %v263 = vld [vmem:[%s7 + $0x2c] sm:$0xf]
  %v264 = vld [vmem:[%s7 + $0x30] sm:$0xf]
  %v265 = vld [vmem:[%s7 + $0x34] sm:$0xf]
  %v266 = vld [vmem:[%s7 + $0x38] sm:$0xf]
  %v267 = vld [vmem:[%s7 + $0x3c] sm:$0xf]
  %v268 = vld [vmem:[%s8] sm:$0x1]
  %v270 = vlaneseq
  %v271 = vshrl.u32 %v270, 7
  %v272 = vsub.s32 0, %v271
  %v273 = vrot.slane %v268, %v272
  %v291 = vunpack.c.l.b16 %v252
  %v292 = vunpack.c.l.b16 %v253
  %v293 = vunpack.c.l.b16 %v254
  %v294 = vunpack.c.l.b16 %v255
  %v295 = vunpack.c.l.b16 %v256
  %v296 = vunpack.c.l.b16 %v257
  %v297 = vunpack.c.l.b16 %v258
  %v298 = vunpack.c.l.b16 %v259
  %v299 = vunpack.c.l.b16 %v260
  %v300 = vunpack.c.l.b16 %v261
  %v301 = vunpack.c.l.b16 %v262
  %v302 = vunpack.c.l.b16 %v263
  %v303 = vunpack.c.l.b16 %v264
  %v304 = vunpack.c.l.b16 %v265
  %v305 = vunpack.c.l.b16 %v266
  %v306 = vunpack.c.l.b16 %v267
  %v307 = vpack.c.b16 %v292, %v291
  %v308 = vpack.c.b16 %v294, %v293
  %v309 = vpack.c.b16 %v296, %v295
  %v310 = vpack.c.b16 %v298, %v297
  %v311 = vpack.c.b16 %v300, %v299
  %v312 = vpack.c.b16 %v302, %v301
  %v313 = vpack.c.b16 %v304, %v303
  %v314 = vpack.c.b16 %v306, %v305
  %323 = vmatprep.subr.bf16.mxu0 0
  %324 = vmatpush1.bf16.msra.mxu0 %v307
  %325 = vmatprep.subr.bf16.mxu0 0
  %326 = vmatpush1.bf16.msra.mxu0 %v308
  %327 = vmatprep.subr.bf16.mxu0 0
  %328 = vmatpush1.bf16.msra.mxu0 %v309
  %329 = vmatprep.subr.bf16.mxu0 0
  %330 = vmatpush1.bf16.msra.mxu0 %v310
  %331 = vmatprep.subr.bf16.mxu0 0
  %332 = vmatpush1.bf16.msra.mxu0 %v311
  %333 = vmatprep.subr.bf16.mxu0 0
  %334 = vmatpush1.bf16.msra.mxu0 %v312
  %335 = vmatprep.subr.bf16.mxu0 0
  %336 = vmatpush1.bf16.msra.mxu0 %v313
  %337 = vmatprep.subr.bf16.mxu0 0
  %338 = vmatpush1.bf16.msra.mxu0 %v314
  %339 = vmatprep.subr.bf16.mxu0 0
  %340 = vmatpush1.bf16.msra.mxu0 0
  %341 = vmatprep.subr.bf16.mxu0 0
  %342 = vmatpush1.bf16.msra.mxu0 0
  %343 = vmatprep.subr.bf16.mxu0 0
  %344 = vmatpush1.bf16.msra.mxu0 0
  %345 = vmatprep.subr.bf16.mxu0 0
  %346 = vmatpush1.bf16.msra.mxu0 0
  %347 = vmatprep.subr.bf16.mxu0 0
  %348 = vmatpush1.bf16.msra.mxu0 0
  %349 = vmatprep.subr.bf16.mxu0 0
  %350 = vmatpush1.bf16.msra.mxu0 0
  %351 = vmatprep.subr.bf16.mxu0 0
  %352 = vmatpush1.bf16.msra.mxu0 0
  %353 = vmatprep.subr.bf16.mxu0 0
  %354 = vmatpush1.bf16.msra.mxu0 0
  %355 = vmatprep.mubr.bf16.mxu0 0
  %356 = vmatmul.mubr.bf16.gmra.mrb[0].mxu0 %v251
  %v357 = vpop.f32.mrb[0].mxu0
  %v358 = vadd.f32 %v273, %v357
  %v359 = vpop.f32.mrb[0].mxu0
  %v360 = vpop.f32.mrb[0].mxu0
  %v361 = vpop.f32.mrb[0].mxu0
  %362 = vdwg.mxu0
  %vm363 = vcmp.gt.f32.partialorder %v358, 0.0
  %v364 = vmul.f32 %v358, 0.1
  %v365 = vsel %vm363, %v358, %v364
  %v366 = vld [vmem:[%s9] sm:$0x1]
  %v368 = vlaneseq
  %v369 = vshrl.u32 %v368, 7
  %v370 = vsub.s32 0, %v369
  %v371 = vrot.slane %v366, %v370
  %v373 = vmul.f32 %v365, %v371
  %374 = vadd.xlane.f32.xlu0 %v373
  %v375 = vpop.xlane.xlu0 %374
  %s376 = sld [smem:[#allocation2]]
  %v377 = vstv %s376
  %v378 = vadd.f32 %v375, %v377
  %vm379 = vcmask 7168
  %380 = vst.msk [vmem:[%s11] sm:$0xff] %vm379, %v378
  // Predicated region
  $region46: #{critic_forward.1} parent=0 // pred_check
    _
  $region47: #{critic_forward.1} parent=0 // pred_check_branch
    %382 = sbr.rel (0) target = $region49
  $region48: #{critic_forward.1} parent=0 // pred_region
    _
  $region49: #{critic_forward.1} parent=0 // pred_fallthru
    _
  // Predicated region
  $region50: #{critic_forward.1} parent=0 // pred_check
    _
  $region51: #{critic_forward.1} parent=0 // pred_check_branch
    %384 = sbr.rel (0) target = $region53
  $region52: #{critic_forward.1} parent=0 // pred_region
    _
  $region53: #{critic_forward.1} parent=0 // pred_fallthru
    _

</llo_original>
